<compile_context>
chip_gen: v7x
topology: tpu7x:2x2x1
jax: 0.10.0
libtpu: 0.0.40
codegen_flags: <defaults>
</compile_context>

<pallas_src>
import jax
import jax.numpy as jnp
from jax.experimental import pallas as pl
from jax.experimental.pallas import tpu as pltpu

INFINITY_NUMBER = 1e12  # constant.INFINITY_NUMBER in the original repo


def _round_up(x, m):
    return ((x + m - 1) // m) * m


def _pad_to(x, shape):
    return jnp.pad(x, [(0, s - d) for d, s in zip(x.shape, shape)])


def gcn_classifier_kernel(words_ref, caps_ref, emb_ref, w1_ref, b1_ref,
                          w2_ref, b2_ref, wc_ref, bc_ref, out_ref):
    """In-kernel batched one-hot gather + fused dual masked max-pool + MLP + clf."""
    TBT = words_ref.shape[0]            # block_b * T (flattened batch-tile * seq)
    TB = out_ref.shape[0]               # block_b
    T = TBT // TB
    Vp, Ep = emb_ref.shape

    # --- embedding gather: ONE (TBT, Vp) @ (Vp, Ep) bf16 matmul, f32 accumulation.
    # one-hot values {0,1} are exact in bf16; iota is (1, Vp) and broadcast in the
    # compare (no (TBT, Vp) int iota kept live).
    iota_v = jax.lax.broadcasted_iota(jnp.int32, (1, Vp), 1)
    onehot = (words_ref[...] == iota_v).astype(jnp.bfloat16)          # (TBT, Vp)
    hflat = jnp.dot(onehot, emb_ref[...],
                    preferred_element_type=jnp.float32)               # (TBT, Ep) f32

    # --- fused dual masked max-pool.  caps are +INF (keep) / -INF (drop), so
    # masked_fill(-INF) + max  ==  max(min(h, cap)).  All f32 VPU work.
    caps = caps_ref[...]                                              # (TBT, 2) f32
    h_out = jnp.max(jnp.minimum(hflat, caps[:, 0:1]).reshape(TB, T, Ep), axis=1)
    a_out = jnp.max(jnp.minimum(hflat, caps[:, 1:2]).reshape(TB, T, Ep), axis=1)

    # --- out_mlp layer 1: concat at a 128-lane-group boundary (no relayout), single
    # K=2*Ep dot (fills the 256-deep MXU on v6e/v7x).  bf16 cast of h_out/a_out is
    # lossless (maxima of bf16-exact embedding values).
    xcat = jnp.concatenate([h_out, a_out], axis=-1).astype(jnp.bfloat16)
    x = jnp.maximum(
        jnp.dot(xcat, w1_ref[...], preferred_element_type=jnp.float32)
        + b1_ref[...], 0.0)
    # --- out_mlp layer 2
    x = jnp.maximum(
        jnp.dot(x.astype(jnp.bfloat16), w2_ref[...],
                preferred_element_type=jnp.float32) + b2_ref[...], 0.0)
    # --- classifier (lane-dense padded output; padding sliced off in the wrapper)
    out_ref[...] = (
        jnp.dot(x.astype(jnp.bfloat16), wc_ref[...],
                preferred_element_type=jnp.float32) + bc_ref[...])


def gcn_classifier_forward(words, masks, acronym, params, *, block_b=None):
    B, T = words.shape
    emb = params["emb"].astype(jnp.float32)          # (V, E)
    V, E = emb.shape
    w1 = params["w1"]                                # (2E, H)
    H = w1.shape[1]
    C = params["wc"].shape[1]

    # --- pad weights to lane-dense (multiple-of-128) shapes; MXU operands -> bf16 --
    Vp = _round_up(V, 128)
    Ep = _round_up(E, 128)
    Hp = _round_up(H, 128)
    Cp = _round_up(C, 128)
    emb_p = _pad_to(emb, (Vp, Ep)).astype(jnp.bfloat16)
    # split W1 rows at E, pad each half to Ep, re-merge -> matches concat([h, a]).
    w1m = jnp.concatenate([_pad_to(w1[:E], (Ep, Hp)),
                           _pad_to(w1[E:], (Ep, Hp))], axis=0).astype(jnp.bfloat16)
    b1 = _pad_to(params["b1"], (1, Hp)).astype(jnp.float32)
    w2 = _pad_to(params["w2"], (Hp, Hp)).astype(jnp.bfloat16)
    b2 = _pad_to(params["b2"], (1, Hp)).astype(jnp.float32)
    wc = _pad_to(params["wc"], (Hp, Cp)).astype(jnp.bfloat16)
    bc = _pad_to(params["bc"], (1, Cp)).astype(jnp.float32)

    # --- batch tiling: default 128 (sweep {64,128,256} for big batches); ensure at
    # least 2 grid steps when the batch allows so "parallel" shards across v7x TCs.
    if block_b is None:
        block_b = min(128, _round_up(B, 8))
        if B >= 16 and _round_up(B, block_b) // block_b < 2:
            block_b = max(8, _round_up((B + 1) // 2, 8))
    Bp = _round_up(B, block_b)

    # --- merged lane-thin row inputs: flattened word ids + (pool, acr) cap pair ---
    big = jnp.float32(INFINITY_NUMBER)
    neg = jnp.float32(-INFINITY_NUMBER)
    words_p = jnp.pad(words.astype(jnp.int32), ((0, Bp - B), (0, 0)))   # pad -> PAD id 0
    pool_cap = jnp.where(masks != 0, neg, big)
    acr_cap = jnp.where(acronym != 0, neg, big)
    caps = jnp.stack([pool_cap, acr_cap], axis=-1).astype(jnp.float32)  # (B, T, 2)
    caps_p = jnp.pad(caps, ((0, Bp - B), (0, 0), (0, 0)), constant_values=neg)

    words_flat = words_p.reshape(Bp * T, 1)
    caps_flat = caps_p.reshape(Bp * T, 2)

    grid = (Bp // block_b,)
    TBT = block_b * T

    def resident(shape):                              # weights stay VMEM-resident
        return pl.BlockSpec(shape, lambda i: (0, 0))

    out = pl.pallas_call(
        gcn_classifier_kernel,
        out_shape=jax.ShapeDtypeStruct((Bp, Cp), jnp.float32),
        grid=grid,
        in_specs=[pl.BlockSpec((TBT, 1), lambda i: (i, 0)),
                  pl.BlockSpec((TBT, 2), lambda i: (i, 0)),
                  resident((Vp, Ep)),
                  resident((2 * Ep, Hp)), resident((1, Hp)),
                  resident((Hp, Hp)), resident((1, Hp)),
                  resident((Hp, Cp)), resident((1, Cp))],
        out_specs=pl.BlockSpec((block_b, Cp), lambda i: (i, 0)),
        compiler_params=pltpu.CompilerParams(
            dimension_semantics=("parallel",),        # shard batch tiles across TCs
            vmem_limit_bytes=32 * 1024 * 1024),
    )(words_flat, caps_flat, emb_p, w1m, b1, w2, b2, wc, bc)

    return out[:B, :C]


def make_params(key, vocab_size, emb_dim, hidden_dim, num_class):
    ks = jax.random.split(key, 7)
    # nn.Embedding(padding_idx=0); init_embeddings: rows [1:] ~ U(-1, 1), row 0 = 0.
    emb = jax.random.uniform(ks[0], (vocab_size, emb_dim), jnp.float32, -1.0, 1.0)
    emb = emb.at[0].set(0.0)
    in_dim = hidden_dim * 2 * 2  # == 2 * emb_dim
    # Linear weights stored transposed (in, out).
    w1 = jax.random.uniform(ks[1], (in_dim, hidden_dim), jnp.float32, -0.1, 0.1)
    b1 = jax.random.uniform(ks[2], (1, hidden_dim), jnp.float32, -0.1, 0.1)
    w2 = jax.random.uniform(ks[3], (hidden_dim, hidden_dim), jnp.float32, -0.1, 0.1)
    b2 = jax.random.uniform(ks[4], (1, hidden_dim), jnp.float32, -0.1, 0.1)
    wc = jax.random.uniform(ks[5], (hidden_dim, num_class), jnp.float32, -0.1, 0.1)
    bc = jax.random.uniform(ks[6], (1, num_class), jnp.float32, -0.1, 0.1)
    return dict(emb=emb, w1=w1, b1=b1, w2=w2, b2=b2, wc=wc, bc=bc)


def reference_forward(words, masks, acronym, params):
    """Pure-JAX reference of the same forward pass, mirroring the kernel's bf16
    MXU-operand rounding (weights/activations rounded to bf16, f32 accumulation)."""
    def bf(a):
        return a.astype(jnp.bfloat16).astype(jnp.float32)
    neg = jnp.float32(-INFINITY_NUMBER)
    h = jnp.take(bf(params["emb"]), words, axis=0)
    pm = (masks != 0)[:, :, None]
    am = (acronym != 0)[:, :, None]
    h_out = jnp.max(jnp.where(pm, neg, h), axis=1)
    a_out = jnp.max(jnp.where(am, neg, h), axis=1)
    x = jnp.concatenate([h_out, a_out], axis=-1)
    x = jnp.maximum(bf(x) @ bf(params["w1"]) + params["b1"], 0.0)
    x = jnp.maximum(bf(x) @ bf(params["w2"]) + params["b2"], 0.0)
    return bf(x) @ bf(params["wc"]) + params["bc"]


if __name__ == "__main__":
    # opt: vocab_size=50, emb_dim=128, hidden_dim=64, num_class=10,
    #      mlp_layers=2, pooling='max', rnn=False
    # (emb_dim = 2*hidden_dim so out_mlp's in_dim = hidden_dim*2*2 matches.)
    B, T = 2, 8
    VOCAB, EMB, HIDDEN, NUM_CLASS = 50, 128, 64, 10

    key = jax.random.PRNGKey(0)
    kp, kw, ka = jax.random.split(key, 3)

    params = make_params(kp, VOCAB, EMB, HIDDEN, NUM_CLASS)

    # words: pad_id=0 at padded positions; masks: 1 = padding (masked out of pool).
    lengths = jnp.array([6, 5], dtype=jnp.int32)
    pos = jnp.arange(T)[None, :]
    masks = (pos >= lengths[:, None]).astype(jnp.int32)            # (B, T)
    words = jax.random.randint(kw, (B, T), 1, VOCAB).astype(jnp.int32)
    words = jnp.where(masks == 1, 0, words)
    # acronym indicator: nonzero marks acronym tokens (masked out in acronym pool);
    # keep at least one zero per row.
    acronym = jax.random.randint(ka, (B, T), 0, 2).astype(jnp.int32)
    acronym = acronym.at[:, 0].set(0)

    logits = gcn_classifier_forward(words, masks, acronym, params)
    logits = jax.block_until_ready(logits)

    ref = reference_forward(words, masks, acronym, params)
    assert logits.shape == (B, NUM_CLASS)
    assert jnp.allclose(logits, ref, atol=1e-3, rtol=1e-3), (
        jnp.max(jnp.abs(logits - ref)))

    print("KERNEL_OK")
</pallas_src>

<mosaic_0001>
module attributes {stable_mosaic.version = 11 : i64} {
  func.func @gcn_classifier_kernel(%arg0: i32, %arg1: memref<64x1xi32, #tpu.memory_space<vmem>>, %arg2: memref<64x2xf32, #tpu.memory_space<vmem>>, %arg3: memref<128x128xbf16, #tpu.memory_space<vmem>>, %arg4: memref<256x128xbf16, #tpu.memory_space<vmem>>, %arg5: memref<1x128xf32, #tpu.memory_space<vmem>>, %arg6: memref<128x128xbf16, #tpu.memory_space<vmem>>, %arg7: memref<1x128xf32, #tpu.memory_space<vmem>>, %arg8: memref<128x128xbf16, #tpu.memory_space<vmem>>, %arg9: memref<1x128xf32, #tpu.memory_space<vmem>>, %arg10: memref<8x128xf32, #tpu.memory_space<vmem>>) attributes {dimension_semantics = [#tpu.dimension_semantics<parallel>], iteration_bounds = array<i64: 1>, scalar_prefetch = 0 : i64, scratch_operands = 0 : i64, tpu.core_type = #tpu.core_type<tc>, window_params = [{transform_indices = @transform_0, window_bounds = array<i64: 64, 1>}, {transform_indices = @transform_1, window_bounds = array<i64: 64, 2>}, {pipeline_mode = #tpu.pipeline_mode<synchronous>, transform_indices = @transform_2, window_bounds = array<i64: 128, 128>}, {pipeline_mode = #tpu.pipeline_mode<synchronous>, transform_indices = @transform_3, window_bounds = array<i64: 256, 128>}, {pipeline_mode = #tpu.pipeline_mode<synchronous>, transform_indices = @transform_4, window_bounds = array<i64: 1, 128>}, {pipeline_mode = #tpu.pipeline_mode<synchronous>, transform_indices = @transform_5, window_bounds = array<i64: 128, 128>}, {pipeline_mode = #tpu.pipeline_mode<synchronous>, transform_indices = @transform_6, window_bounds = array<i64: 1, 128>}, {pipeline_mode = #tpu.pipeline_mode<synchronous>, transform_indices = @transform_7, window_bounds = array<i64: 128, 128>}, {pipeline_mode = #tpu.pipeline_mode<synchronous>, transform_indices = @transform_8, window_bounds = array<i64: 1, 128>}, {transform_indices = @transform_9, window_bounds = array<i64: 8, 128>}]} {
    %0 = tpu.iota {dimensions = array<i32: 1>} : vector<1x128xi32>
    %c0 = arith.constant 0 : index
    %c0_0 = arith.constant 0 : index
    %1 = vector.load %arg1[%c0, %c0_0] : memref<64x1xi32, #tpu.memory_space<vmem>>, vector<64x1xi32>
    %2 = vector.broadcast %1 : vector<64x1xi32> to vector<64x128xi32>
    %3 = vector.broadcast %0 : vector<1x128xi32> to vector<64x128xi32>
    %4 = arith.cmpi eq, %2, %3 : vector<64x128xi32>
    %5 = arith.extui %4 : vector<64x128xi1> to vector<64x128xi32>
    %6 = arith.sitofp %5 : vector<64x128xi32> to vector<64x128xf32>
    %7 = arith.truncf %6 : vector<64x128xf32> to vector<64x128xbf16>
    %c0_1 = arith.constant 0 : index
    %c0_2 = arith.constant 0 : index
    %8 = vector.load %arg3[%c0_1, %c0_2] : memref<128x128xbf16, #tpu.memory_space<vmem>>, vector<128x128xbf16>
    %cst = arith.constant dense<0.000000e+00> : vector<64x128xf32>
    %9 = tpu.matmul %7, %8, %cst {dimension_numbers = #tpu.dot_dimension_numbers<[1], [0], [0], [1], [0, 0, 1, 1], [], []>} : vector<64x128xbf16>, vector<128x128xbf16>, vector<64x128xf32> -> vector<64x128xf32>
    %c0_3 = arith.constant 0 : index
    %c0_4 = arith.constant 0 : index
    %10 = vector.load %arg2[%c0_3, %c0_4] : memref<64x2xf32, #tpu.memory_space<vmem>>, vector<64x2xf32>
    %11 = vector.extract_strided_slice %10 {offsets = [0, 0], sizes = [64, 1], strides = [1, 1]} : vector<64x2xf32> to vector<64x1xf32>
    %12 = vector.broadcast %11 : vector<64x1xf32> to vector<64x128xf32>
    %13 = arith.minimumf %9, %12 : vector<64x128xf32>
    %14 = vector.shape_cast %13 : vector<64x128xf32> to vector<8x8x128xf32>
    %cst_5 = arith.constant dense<0xFF800000> : vector<8x128xf32>
    %15 = vector.multi_reduction <maximumf>, %14, %cst_5 [1] : vector<8x8x128xf32> to vector<8x128xf32>
    %16 = vector.extract_strided_slice %10 {offsets = [0, 1], sizes = [64, 1], strides = [1, 1]} : vector<64x2xf32> to vector<64x1xf32>
    %17 = vector.broadcast %16 : vector<64x1xf32> to vector<64x128xf32>
    %18 = arith.minimumf %9, %17 : vector<64x128xf32>
    %19 = vector.shape_cast %18 : vector<64x128xf32> to vector<8x8x128xf32>
    %cst_6 = arith.constant dense<0xFF800000> : vector<8x128xf32>
    %20 = vector.multi_reduction <maximumf>, %19, %cst_6 [1] : vector<8x8x128xf32> to vector<8x128xf32>
    %21 = tpu.concatenate %15, %20 in 1 : vector<8x128xf32>, vector<8x128xf32> -> vector<8x256xf32>
    %22 = arith.truncf %21 : vector<8x256xf32> to vector<8x256xbf16>
    %c0_7 = arith.constant 0 : index
    %c0_8 = arith.constant 0 : index
    %23 = vector.load %arg4[%c0_7, %c0_8] : memref<256x128xbf16, #tpu.memory_space<vmem>>, vector<256x128xbf16>
    %cst_9 = arith.constant dense<0.000000e+00> : vector<8x128xf32>
    %24 = tpu.matmul %22, %23, %cst_9 {dimension_numbers = #tpu.dot_dimension_numbers<[1], [0], [0], [1], [0, 0, 1, 1], [], []>} : vector<8x256xbf16>, vector<256x128xbf16>, vector<8x128xf32> -> vector<8x128xf32>
    %c0_10 = arith.constant 0 : index
    %c0_11 = arith.constant 0 : index
    %25 = vector.load %arg5[%c0_10, %c0_11] : memref<1x128xf32, #tpu.memory_space<vmem>>, vector<1x128xf32>
    %26 = vector.broadcast %25 : vector<1x128xf32> to vector<8x128xf32>
    %27 = arith.addf %24, %26 : vector<8x128xf32>
    %cst_12 = arith.constant 0.000000e+00 : f32
    %28 = vector.broadcast %cst_12 : f32 to vector<8x128xf32>
    %29 = arith.maximumf %27, %28 : vector<8x128xf32>
    %30 = arith.truncf %29 : vector<8x128xf32> to vector<8x128xbf16>
    %c0_13 = arith.constant 0 : index
    %c0_14 = arith.constant 0 : index
    %31 = vector.load %arg6[%c0_13, %c0_14] : memref<128x128xbf16, #tpu.memory_space<vmem>>, vector<128x128xbf16>
    %cst_15 = arith.constant dense<0.000000e+00> : vector<8x128xf32>
    %32 = tpu.matmul %30, %31, %cst_15 {dimension_numbers = #tpu.dot_dimension_numbers<[1], [0], [0], [1], [0, 0, 1, 1], [], []>} : vector<8x128xbf16>, vector<128x128xbf16>, vector<8x128xf32> -> vector<8x128xf32>
    %c0_16 = arith.constant 0 : index
    %c0_17 = arith.constant 0 : index
    %33 = vector.load %arg7[%c0_16, %c0_17] : memref<1x128xf32, #tpu.memory_space<vmem>>, vector<1x128xf32>
    %34 = vector.broadcast %33 : vector<1x128xf32> to vector<8x128xf32>
    %35 = arith.addf %32, %34 : vector<8x128xf32>
    %cst_18 = arith.constant 0.000000e+00 : f32
    %36 = vector.broadcast %cst_18 : f32 to vector<8x128xf32>
    %37 = arith.maximumf %35, %36 : vector<8x128xf32>
    %38 = arith.truncf %37 : vector<8x128xf32> to vector<8x128xbf16>
    %c0_19 = arith.constant 0 : index
    %c0_20 = arith.constant 0 : index
    %39 = vector.load %arg8[%c0_19, %c0_20] : memref<128x128xbf16, #tpu.memory_space<vmem>>, vector<128x128xbf16>
    %cst_21 = arith.constant dense<0.000000e+00> : vector<8x128xf32>
    %40 = tpu.matmul %38, %39, %cst_21 {dimension_numbers = #tpu.dot_dimension_numbers<[1], [0], [0], [1], [0, 0, 1, 1], [], []>} : vector<8x128xbf16>, vector<128x128xbf16>, vector<8x128xf32> -> vector<8x128xf32>
    %c0_22 = arith.constant 0 : index
    %c0_23 = arith.constant 0 : index
    %41 = vector.load %arg9[%c0_22, %c0_23] : memref<1x128xf32, #tpu.memory_space<vmem>>, vector<1x128xf32>
    %42 = vector.broadcast %41 : vector<1x128xf32> to vector<8x128xf32>
    %43 = arith.addf %40, %42 : vector<8x128xf32>
    %c0_24 = arith.constant 0 : index
    %c0_25 = arith.constant 0 : index
    %44 = vector.load %arg10[%c0_24, %c0_25] : memref<8x128xf32, #tpu.memory_space<vmem>>, vector<8x128xf32>
    tpu.vector_store %arg10[%c0_24, %c0_25], %43 {strides = array<i32>} : memref<8x128xf32, #tpu.memory_space<vmem>>, vector<8x128xf32>,
    return
  }
  func.func @transform_0(%arg0: i32) -> (i32, i32) {
    %c0_i32 = arith.constant 0 : i32
    %c0_i32_0 = arith.constant 0 : i32
    return %arg0, %c0_i32 : i32, i32
  }
  func.func @transform_1(%arg0: i32) -> (i32, i32) {
    %c0_i32 = arith.constant 0 : i32
    %c0_i32_0 = arith.constant 0 : i32
    return %arg0, %c0_i32 : i32, i32
  }
  func.func @transform_2(%arg0: i32) -> (i32, i32) {
    %c0_i32 = arith.constant 0 : i32
    %c0_i32_0 = arith.constant 0 : i32
    %c0_i32_1 = arith.constant 0 : i32
    return %c0_i32, %c0_i32_0 : i32, i32
  }
  func.func @transform_3(%arg0: i32) -> (i32, i32) {
    %c0_i32 = arith.constant 0 : i32
    %c0_i32_0 = arith.constant 0 : i32
    %c0_i32_1 = arith.constant 0 : i32
    return %c0_i32, %c0_i32_0 : i32, i32
  }
  func.func @transform_4(%arg0: i32) -> (i32, i32) {
    %c0_i32 = arith.constant 0 : i32
    %c0_i32_0 = arith.constant 0 : i32
    %c0_i32_1 = arith.constant 0 : i32
    return %c0_i32, %c0_i32_0 : i32, i32
  }
  func.func @transform_5(%arg0: i32) -> (i32, i32) {
    %c0_i32 = arith.constant 0 : i32
    %c0_i32_0 = arith.constant 0 : i32
    %c0_i32_1 = arith.constant 0 : i32
    return %c0_i32, %c0_i32_0 : i32, i32
  }
  func.func @transform_6(%arg0: i32) -> (i32, i32) {
    %c0_i32 = arith.constant 0 : i32
    %c0_i32_0 = arith.constant 0 : i32
    %c0_i32_1 = arith.constant 0 : i32
    return %c0_i32, %c0_i32_0 : i32, i32
  }
  func.func @transform_7(%arg0: i32) -> (i32, i32) {
    %c0_i32 = arith.constant 0 : i32
    %c0_i32_0 = arith.constant 0 : i32
    %c0_i32_1 = arith.constant 0 : i32
    return %c0_i32, %c0_i32_0 : i32, i32
  }
  func.func @transform_8(%arg0: i32) -> (i32, i32) {
    %c0_i32 = arith.constant 0 : i32
    %c0_i32_0 = arith.constant 0 : i32
    %c0_i32_1 = arith.constant 0 : i32
    return %c0_i32, %c0_i32_0 : i32, i32
  }
  func.func @transform_9(%arg0: i32) -> (i32, i32) {
    %c0_i32 = arith.constant 0 : i32
    %c0_i32_0 = arith.constant 0 : i32
    return %arg0, %c0_i32 : i32, i32
  }
}

</mosaic_0001>

<llo_original>
// kernel: tpu_custom_call.1
$region0: #{tpu_custom_call.1}
  #allocation0 [shape = 'u32[]', space=smem, size = 0x4, offset = 0x4, fixed_abs, tag = 'smem constant byte address 0x4 - core index']
  #allocation1 [shape = 'u32[144,128]{1,0:T(1,128)}', space=vmem, size = 0x12000, scoped, tag = 'internal scratch']
  %s0 = inlined_call_operand.vmem [shape: s32[64,1], index: 0, kind: input, shape index: {}]
  %s1 = inlined_call_operand.vmem [shape: f32[64,2], index: 1, kind: input, shape index: {}]
  %s2 = inlined_call_operand.hbm [shape: bf16[128,128], index: 2, kind: input, shape index: {}]
  %s3 = inlined_call_operand.vmem [shape: bf16[256,128], index: 3, kind: input, shape index: {}]
  %s4 = inlined_call_operand.vmem [shape: f32[1,128], index: 4, kind: input, shape index: {}]
  %s5 = inlined_call_operand.hbm [shape: bf16[128,128], index: 5, kind: input, shape index: {}]
  %s6 = inlined_call_operand.vmem [shape: f32[1,128], index: 6, kind: input, shape index: {}]
  %s7 = inlined_call_operand.hbm [shape: bf16[128,128], index: 7, kind: input, shape index: {}]
  %s8 = inlined_call_operand.vmem [shape: f32[1,128], index: 8, kind: input, shape index: {}]
  %s9 = inlined_call_operand.hbm [shape: f32[8,128], index: 9, kind: output, shape index: {}]
  %s10 = sld [smem:[#allocation0]]
  $region58: #{tpu_custom_call.1} parent=0
    _
  %s12 = ssub.s32 1, %s10
  %s13 = scalar_select 0, %s12, %s10
  $region1: #{tpu_custom_call.1} parent=0
    #allocation2 [shape = 'u8[32768]{0}', space=vmem, size = 0x8000, scoped, tag = 'input window, operand 2, single buffered']
    #allocation3 [shape = 's32[1]{0}', space=sflag, size = 0x4, scoped, tag = 'scoped memory for tpu_custom_call.1']
    #allocation4 [shape = 's32[1]{0}', space=sflag, size = 0x4, scoped, tag = 'scoped memory for tpu_custom_call.1']
    #allocation5 [shape = 'u8[32768]{0}', space=vmem, size = 0x8000, scoped, tag = 'input window, operand 5, single buffered']
    #allocation6 [shape = 's32[1]{0}', space=sflag, size = 0x4, scoped, tag = 'scoped memory for tpu_custom_call.1']
    #allocation7 [shape = 'u8[32768]{0}', space=vmem, size = 0x8000, scoped, tag = 'input window, operand 7, single buffered']
    #allocation8 [shape = 'u8[4096]{0}', space=vmem, size = 0x1000, scoped, tag = 'output window, operand 0, single buffered']
    %14 = vsyncpa [#allocation3], 0
    %15 = vsyncpa [#allocation6], 0
    %16 = vsyncpa [#allocation4], 0
    // Predicated region
    $region2: #{tpu_custom_call.1} parent=1 // pred_check
      _
    $region3: #{tpu_custom_call.1} parent=1 // pred_check_branch
      %18 = sbr.rel (0) target = $region5
    $region4: #{tpu_custom_call.1} parent=1 // pred_region
      _
    $region5: #{tpu_custom_call.1} parent=1 // pred_fallthru
      _
    // Predicated region
    $region6: #{tpu_custom_call.1} parent=1 // pred_check
      _
    $region7: #{tpu_custom_call.1} parent=1 // pred_check_branch
      %20 = sbr.rel (0) target = $region9
    $region8: #{tpu_custom_call.1} parent=1 // pred_region
      _
    $region9: #{tpu_custom_call.1} parent=1 // pred_fallthru
      _
    // Predicated region
    $region10: #{tpu_custom_call.1} parent=1 // pred_check
      _
    $region11: #{tpu_custom_call.1} parent=1 // pred_check_branch
      %22 = sbr.rel (0) target = $region13
    $region12: #{tpu_custom_call.1} parent=1 // pred_region
      %s24 = ssub.s32 1024, 1024
      %25 = vsyncadd [#allocation3], %s24
      %s26 = sshll.u32 [#allocation2], 4
      %s27 = int_to_ptr.vmem [resolvable:$true] %s26
      %32 = dma.hbm_to_vmem [thread:$0]  %s2, 1024, %s27, [#allocation3], 64, 64, 4
    $region13: #{tpu_custom_call.1} parent=1 // pred_fallthru
      _
    // Predicated region
    $region14: #{tpu_custom_call.1} parent=1 // pred_check
      _
    $region15: #{tpu_custom_call.1} parent=1 // pred_check_branch
      %34 = sbr.rel (0) target = $region17
    $region16: #{tpu_custom_call.1} parent=1 // pred_region
      _
    $region17: #{tpu_custom_call.1} parent=1 // pred_fallthru
      _
    // Predicated region
    $region18: #{tpu_custom_call.1} parent=1 // pred_check
      _
    $region19: #{tpu_custom_call.1} parent=1 // pred_check_branch
      %36 = sbr.rel (0) target = $region21
    $region20: #{tpu_custom_call.1} parent=1 // pred_region
      _
    $region21: #{tpu_custom_call.1} parent=1 // pred_fallthru
      _
    // Predicated region
    $region22: #{tpu_custom_call.1} parent=1 // pred_check
      _
    $region23: #{tpu_custom_call.1} parent=1 // pred_check_branch
      %38 = sbr.rel (0) target = $region25
    $region24: #{tpu_custom_call.1} parent=1 // pred_region
      %s40 = ssub.s32 1024, 1024
      %41 = vsyncadd [#allocation6], %s40
      %s42 = sshll.u32 [#allocation5], 4
      %s43 = int_to_ptr.vmem [resolvable:$true] %s42
      %48 = dma.hbm_to_vmem [thread:$0]  %s5, 1024, %s43, [#allocation6], 64, 64, 4
    $region25: #{tpu_custom_call.1} parent=1 // pred_fallthru
      _
    // Predicated region
    $region26: #{tpu_custom_call.1} parent=1 // pred_check
      _
    $region27: #{tpu_custom_call.1} parent=1 // pred_check_branch
      %50 = sbr.rel (0) target = $region29
    $region28: #{tpu_custom_call.1} parent=1 // pred_region
      _
    $region29: #{tpu_custom_call.1} parent=1 // pred_fallthru
      _
    // Predicated region
    $region30: #{tpu_custom_call.1} parent=1 // pred_check
      _
    $region31: #{tpu_custom_call.1} parent=1 // pred_check_branch
      %52 = sbr.rel (0) target = $region33
    $region32: #{tpu_custom_call.1} parent=1 // pred_region
      %s54 = ssub.s32 1024, 1024
      %55 = vsyncadd [#allocation6], %s54
      %s56 = sshll.u32 [#allocation7], 4
      %s57 = int_to_ptr.vmem [resolvable:$true] %s56
      %62 = dma.hbm_to_vmem [thread:$0]  %s7, 1024, %s57, [#allocation6], 64, 64, 4
    $region33: #{tpu_custom_call.1} parent=1 // pred_fallthru
      _
    // Predicated region
    $region34: #{tpu_custom_call.1} parent=1 // pred_check
      _
    $region35: #{tpu_custom_call.1} parent=1 // pred_check_branch
      %64 = sbr.rel (0) target = $region37
    $region36: #{tpu_custom_call.1} parent=1 // pred_region
      _
    $region37: #{tpu_custom_call.1} parent=1 // pred_fallthru
      _
    // Predicated region
    $region38: #{tpu_custom_call.1} parent=1 // pred_check
      _
    $region39: #{tpu_custom_call.1} parent=1 // pred_check_branch
      %66 = sbr.rel (0) target = $region41
    $region40: #{tpu_custom_call.1} parent=1 // pred_region
      %67 = dma.done [#allocation3], 1024
    $region41: #{tpu_custom_call.1} parent=1 // pred_fallthru
      _
    // Predicated region
    $region42: #{tpu_custom_call.1} parent=1 // pred_check
      _
    $region43: #{tpu_custom_call.1} parent=1 // pred_check_branch
      %69 = sbr.rel (0) target = $region45
    $region44: #{tpu_custom_call.1} parent=1 // pred_region
      %70 = dma.done [#allocation6], 1024
    $region45: #{tpu_custom_call.1} parent=1 // pred_fallthru
      _
    // Predicated region
    $region46: #{tpu_custom_call.1} parent=1 // pred_check
      _
    $region47: #{tpu_custom_call.1} parent=1 // pred_check_branch
      %72 = sbr.rel (0) target = $region49
    $region48: #{tpu_custom_call.1} parent=1 // pred_region
      %73 = dma.done [#allocation6], 1024
    $region49: #{tpu_custom_call.1} parent=1 // pred_fallthru
      _
    %v75 = vlaneseq
    %v76 = vand.u32 %v75, 127
    %v77 = vld [vmem:[%s0] sm:$0xff]
    %v78 = vld [vmem:[%s0 + $0x8] sm:$0xff]
    %v79 = vld [vmem:[%s0 + $0x10] sm:$0xff]
    %v80 = vld [vmem:[%s0 + $0x18] sm:$0xff]
    %v81 = vld [vmem:[%s0 + $0x20] sm:$0xff]
    %v82 = vld [vmem:[%s0 + $0x28] sm:$0xff]
    %v83 = vld [vmem:[%s0 + $0x30] sm:$0xff]
    %v84 = vld [vmem:[%s0 + $0x38] sm:$0xff]
    %85 = vset.pattern.permute.xlu0 0
    %86 = vperm.xlu0 %85, %v77
    %v87 = vpop.permute.xlu0 %86
    %88 = vset.pattern.permute.xlu0 0
    %89 = vperm.xlu0 %88, %v78
    %v90 = vpop.permute.xlu0 %89
    %91 = vset.pattern.permute.xlu0 0
    %92 = vperm.xlu0 %91, %v79
    %v93 = vpop.permute.xlu0 %92
    %94 = vset.pattern.permute.xlu0 0
    %95 = vperm.xlu0 %94, %v80
    %v96 = vpop.permute.xlu0 %95
    %97 = vset.pattern.permute.xlu0 0
    %98 = vperm.xlu0 %97, %v81
    %v99 = vpop.permute.xlu0 %98
    %100 = vset.pattern.permute.xlu0 0
    %101 = vperm.xlu0 %100, %v82
    %v102 = vpop.permute.xlu0 %101
    %103 = vset.pattern.permute.xlu0 0
    %104 = vperm.xlu0 %103, %v83
    %v105 = vpop.permute.xlu0 %104
    %106 = vset.pattern.permute.xlu0 0
    %107 = vperm.xlu0 %106, %v84
    %v108 = vpop.permute.xlu0 %107
    %vm109 = vcmp.eq.s32.totalorder %v87, %v76
    %vm110 = vcmp.eq.s32.totalorder %v90, %v76
    %vm111 = vcmp.eq.s32.totalorder %v93, %v76
    %vm112 = vcmp.eq.s32.totalorder %v96, %v76
    %vm113 = vcmp.eq.s32.totalorder %v99, %v76
    %vm114 = vcmp.eq.s32.totalorder %v102, %v76
    %vm115 = vcmp.eq.s32.totalorder %v105, %v76
    %vm116 = vcmp.eq.s32.totalorder %v108, %v76
    %v117 = vsel %vm109, 1, 0
    %v118 = vsel %vm110, 1, 0
    %v119 = vsel %vm111, 1, 0
    %v120 = vsel %vm112, 1, 0
    %v121 = vsel %vm113, 1, 0
    %v122 = vsel %vm114, 1, 0
    %v123 = vsel %vm115, 1, 0
    %v124 = vsel %vm116, 1, 0
    %v125 = vcvt.s32.f32 %v117
    %v126 = vcvt.s32.f32 %v118
    %v127 = vcvt.s32.f32 %v119
    %v128 = vcvt.s32.f32 %v120
    %v129 = vcvt.s32.f32 %v121
    %v130 = vcvt.s32.f32 %v122
    %v131 = vcvt.s32.f32 %v123
    %v132 = vcvt.s32.f32 %v124
    %v133 = vpack.c.bf16 %v126, %v125
    %v134 = vpack.c.bf16 %v128, %v127
    %v135 = vpack.c.bf16 %v130, %v129
    %v136 = vpack.c.bf16 %v132, %v131
    %v137 = vld [vmem:[#allocation2] sm:$0xf]
    %v138 = vld [vmem:[#allocation2 + $0x4] sm:$0xf]
    %v139 = vld [vmem:[#allocation2 + $0x8] sm:$0xf]
    %v140 = vld [vmem:[#allocation2 + $0xc] sm:$0xf]
    %v141 = vld [vmem:[#allocation2 + $0x10] sm:$0xf]
    %v142 = vld [vmem:[#allocation2 + $0x14] sm:$0xf]
    %v143 = vld [vmem:[#allocation2 + $0x18] sm:$0xf]
    %v144 = vld [vmem:[#allocation2 + $0x1c] sm:$0xf]
    %v145 = vld [vmem:[#allocation2 + $0x20] sm:$0xf]
    %v146 = vld [vmem:[#allocation2 + $0x24] sm:$0xf]
    %v147 = vld [vmem:[#allocation2 + $0x28] sm:$0xf]
    %v148 = vld [vmem:[#allocation2 + $0x2c] sm:$0xf]
    %v149 = vld [vmem:[#allocation2 + $0x30] sm:$0xf]
    %v150 = vld [vmem:[#allocation2 + $0x34] sm:$0xf]
    %v151 = vld [vmem:[#allocation2 + $0x38] sm:$0xf]
    %v152 = vld [vmem:[#allocation2 + $0x3c] sm:$0xf]
    %v169 = vunpack.c.l.b16 %v137
    %v170 = vunpack.c.l.b16 %v138
    %v171 = vunpack.c.l.b16 %v139
    %v172 = vunpack.c.l.b16 %v140
    %v173 = vunpack.c.l.b16 %v141
    %v174 = vunpack.c.l.b16 %v142
    %v175 = vunpack.c.l.b16 %v143
    %v176 = vunpack.c.l.b16 %v144
    %v177 = vunpack.c.l.b16 %v145
    %v178 = vunpack.c.l.b16 %v146
    %v179 = vunpack.c.l.b16 %v147
    %v180 = vunpack.c.l.b16 %v148
    %v181 = vunpack.c.l.b16 %v149
    %v182 = vunpack.c.l.b16 %v150
    %v183 = vunpack.c.l.b16 %v151
    %v184 = vunpack.c.l.b16 %v152
    %v185 = vpack.c.b16 %v170, %v169
    %v186 = vpack.c.b16 %v172, %v171
    %v187 = vpack.c.b16 %v174, %v173
    %v188 = vpack.c.b16 %v176, %v175
    %v189 = vpack.c.b16 %v178, %v177
    %v190 = vpack.c.b16 %v180, %v179
    %v191 = vpack.c.b16 %v182, %v181
    %v192 = vpack.c.b16 %v184, %v183
    %201 = vmatprep.subr.bf16.mxu0 0
    %202 = vmatpush1.bf16.msra.mxu0 %v185
    %203 = vmatprep.subr.bf16.mxu0 0
    %204 = vmatpush1.bf16.msra.mxu0 %v186
    %205 = vmatprep.subr.bf16.mxu0 0
    %206 = vmatpush1.bf16.msra.mxu0 %v187
    %207 = vmatprep.subr.bf16.mxu0 0
    %208 = vmatpush1.bf16.msra.mxu0 %v188
    %209 = vmatprep.subr.bf16.mxu0 0
    %210 = vmatpush1.bf16.msra.mxu0 %v189
    %211 = vmatprep.subr.bf16.mxu0 0
    %212 = vmatpush1.bf16.msra.mxu0 %v190
    %213 = vmatprep.subr.bf16.mxu0 0
    %214 = vmatpush1.bf16.msra.mxu0 %v191
    %215 = vmatprep.subr.bf16.mxu0 0
    %216 = vmatpush1.bf16.msra.mxu0 %v192
    %217 = vmatprep.subr.bf16.mxu0 0
    %218 = vmatpush1.bf16.msra.mxu0 0
    %219 = vmatprep.subr.bf16.mxu0 0
    %220 = vmatpush1.bf16.msra.mxu0 0
    %221 = vmatprep.subr.bf16.mxu0 0
    %222 = vmatpush1.bf16.msra.mxu0 0
    %223 = vmatprep.subr.bf16.mxu0 0
    %224 = vmatpush1.bf16.msra.mxu0 0
    %225 = vmatprep.subr.bf16.mxu0 0
    %226 = vmatpush1.bf16.msra.mxu0 0
    %227 = vmatprep.subr.bf16.mxu0 0
    %228 = vmatpush1.bf16.msra.mxu0 0
    %229 = vmatprep.subr.bf16.mxu0 0
    %230 = vmatpush1.bf16.msra.mxu0 0
    %231 = vmatprep.subr.bf16.mxu0 0
    %232 = vmatpush1.bf16.msra.mxu0 0
    %233 = vmatprep.mubr.bf16.mxu0 0
    %234 = vmatmul.mubr.bf16.gmra.mrb[0].mxu0 %v133
    %v235 = vpop.f32.mrb[0].mxu0
    %v236 = vadd.f32 0.0, %v235
    %v237 = vpop.f32.mrb[0].mxu0
    %v238 = vpop.f32.mrb[0].mxu0
    %v239 = vadd.f32 0.0, %v238
    %v240 = vpop.f32.mrb[0].mxu0
    %241 = vmatprep.mubr.bf16.mxu0 0
    %242 = vmatmul.mubr.bf16.gmra.mrb[0].mxu0 %v134
    %v243 = vpop.f32.mrb[0].mxu0
    %v244 = vadd.f32 0.0, %v243
    %v245 = vpop.f32.mrb[0].mxu0
    %v246 = vpop.f32.mrb[0].mxu0
    %v247 = vadd.f32 0.0, %v246
    %v248 = vpop.f32.mrb[0].mxu0
    %249 = vmatprep.mubr.bf16.mxu0 0
    %250 = vmatmul.mubr.bf16.gmra.mrb[0].mxu0 %v135
    %v251 = vpop.f32.mrb[0].mxu0
    %v252 = vadd.f32 0.0, %v251
    %v253 = vpop.f32.mrb[0].mxu0
    %v254 = vpop.f32.mrb[0].mxu0
    %v255 = vadd.f32 0.0, %v254
    %v256 = vpop.f32.mrb[0].mxu0
    %257 = vmatprep.mubr.bf16.mxu0 0
    %258 = vmatmul.mubr.bf16.gmra.mrb[0].mxu0 %v136
    %v259 = vpop.f32.mrb[0].mxu0
    %v260 = vadd.f32 0.0, %v259
    %v261 = vpop.f32.mrb[0].mxu0
    %v262 = vpop.f32.mrb[0].mxu0
    %v263 = vadd.f32 0.0, %v262
    %v264 = vpop.f32.mrb[0].mxu0
    %265 = vdwg.mxu0
    %v266 = vld [vmem:[%s1] sm:$0xff]
    %v267 = vld [vmem:[%s1 + $0x8] sm:$0xff]
    %v268 = vld [vmem:[%s1 + $0x10] sm:$0xff]
    %v269 = vld [vmem:[%s1 + $0x18] sm:$0xff]
    %v270 = vld [vmem:[%s1 + $0x20] sm:$0xff]
    %v271 = vld [vmem:[%s1 + $0x28] sm:$0xff]
    %v272 = vld [vmem:[%s1 + $0x30] sm:$0xff]
    %v273 = vld [vmem:[%s1 + $0x38] sm:$0xff]
    %275 = vset.pattern.permute.xlu0 0
    %276 = vperm.xlu0 %275, %v266
    %v277 = vpop.permute.xlu0 %276
    %280 = vset.pattern.permute.xlu0 0
    %281 = vperm.xlu0 %280, %v267
    %v282 = vpop.permute.xlu0 %281
    %285 = vset.pattern.permute.xlu0 0
    %286 = vperm.xlu0 %285, %v268
    %v287 = vpop.permute.xlu0 %286
    %290 = vset.pattern.permute.xlu0 0
    %291 = vperm.xlu0 %290, %v269
    %v292 = vpop.permute.xlu0 %291
    %295 = vset.pattern.permute.xlu0 0
    %296 = vperm.xlu0 %295, %v270
    %v297 = vpop.permute.xlu0 %296
    %300 = vset.pattern.permute.xlu0 0
    %301 = vperm.xlu0 %300, %v271
    %v302 = vpop.permute.xlu0 %301
    %305 = vset.pattern.permute.xlu0 0
    %306 = vperm.xlu0 %305, %v272
    %v307 = vpop.permute.xlu0 %306
    %310 = vset.pattern.permute.xlu0 0
    %311 = vperm.xlu0 %310, %v273
    %v312 = vpop.permute.xlu0 %311
    %v314 = vmin.f32 %v236, %v277
    %v315 = vmin.f32 %v239, %v282
    %v316 = vmin.f32 %v244, %v287
    %v317 = vmin.f32 %v247, %v292
    %v318 = vmin.f32 %v252, %v297
    %v319 = vmin.f32 %v255, %v302
    %v320 = vmin.f32 %v260, %v307
    %v321 = vmin.f32 %v263, %v312
    %v322 = vrot.slane %v314, 4
    %v323 = vmax.f32 %v314, %v322
    %v324 = vrot.slane %v323, 2
    %v325 = vmax.f32 %v323, %v324
    %v326 = vrot.slane %v325, 1
    %v327 = vmax.f32 %v325, %v326
    %v328 = vrot.slane %v315, 4
    %v329 = vmax.f32 %v315, %v328
    %v330 = vrot.slane %v329, 2
    %v331 = vmax.f32 %v329, %v330
    %v332 = vrot.slane %v331, 1
    %v333 = vmax.f32 %v331, %v332
    %v334 = vrot.slane %v316, 4
    %v335 = vmax.f32 %v316, %v334
    %v336 = vrot.slane %v335, 2
    %v337 = vmax.f32 %v335, %v336
    %v338 = vrot.slane %v337, 1
    %v339 = vmax.f32 %v337, %v338
    %v340 = vrot.slane %v317, 4
    %v341 = vmax.f32 %v317, %v340
    %v342 = vrot.slane %v341, 2
    %v343 = vmax.f32 %v341, %v342
    %v344 = vrot.slane %v343, 1
    %v345 = vmax.f32 %v343, %v344
    %v346 = vrot.slane %v318, 4
    %v347 = vmax.f32 %v318, %v346
    %v348 = vrot.slane %v347, 2
    %v349 = vmax.f32 %v347, %v348
    %v350 = vrot.slane %v349, 1
    %v351 = vmax.f32 %v349, %v350
    %v352 = vrot.slane %v319, 4
    %v353 = vmax.f32 %v319, %v352
    %v354 = vrot.slane %v353, 2
    %v355 = vmax.f32 %v353, %v354
    %v356 = vrot.slane %v355, 1
    %v357 = vmax.f32 %v355, %v356
    %v358 = vrot.slane %v320, 4
    %v359 = vmax.f32 %v320, %v358
    %v360 = vrot.slane %v359, 2
    %v361 = vmax.f32 %v359, %v360
    %v362 = vrot.slane %v361, 1
    %v363 = vmax.f32 %v361, %v362
    %v364 = vrot.slane %v321, 4
    %v365 = vmax.f32 %v321, %v364
    %v366 = vrot.slane %v365, 2
    %v367 = vmax.f32 %v365, %v366
    %v368 = vrot.slane %v367, 1
    %v369 = vmax.f32 %v367, %v368
    %370 = vset.pattern.permute.xlu0 1
    %371 = vperm.xlu0 %370, %v266
    %v372 = vpop.permute.xlu0 %371
    %374 = vset.pattern.permute.xlu0 1
    %375 = vperm.xlu0 %374, %v267
    %v376 = vpop.permute.xlu0 %375
    %378 = vset.pattern.permute.xlu0 1
    %379 = vperm.xlu0 %378, %v268
    %v380 = vpop.permute.xlu0 %379
    %382 = vset.pattern.permute.xlu0 1
    %383 = vperm.xlu0 %382, %v269
    %v384 = vpop.permute.xlu0 %383
    %386 = vset.pattern.permute.xlu0 1
    %387 = vperm.xlu0 %386, %v270
    %v388 = vpop.permute.xlu0 %387
    %390 = vset.pattern.permute.xlu0 1
    %391 = vperm.xlu0 %390, %v271
    %v392 = vpop.permute.xlu0 %391
    %394 = vset.pattern.permute.xlu0 1
    %395 = vperm.xlu0 %394, %v272
    %v396 = vpop.permute.xlu0 %395
    %398 = vset.pattern.permute.xlu0 1
    %399 = vperm.xlu0 %398, %v273
    %v400 = vpop.permute.xlu0 %399
    %v402 = vmin.f32 %v236, %v372
    %v403 = vmin.f32 %v239, %v376
    %v404 = vmin.f32 %v244, %v380
    %v405 = vmin.f32 %v247, %v384
    %v406 = vmin.f32 %v252, %v388
    %v407 = vmin.f32 %v255, %v392
    %v408 = vmin.f32 %v260, %v396
    %v409 = vmin.f32 %v263, %v400
    %v410 = vrot.slane %v402, 4
    %v411 = vmax.f32 %v402, %v410
    %v412 = vrot.slane %v411, 2
    %v413 = vmax.f32 %v411, %v412
    %v414 = vrot.slane %v413, 1
    %v415 = vmax.f32 %v413, %v414
    %v416 = vrot.slane %v403, 4
    %v417 = vmax.f32 %v403, %v416
    %v418 = vrot.slane %v417, 2
    %v419 = vmax.f32 %v417, %v418
    %v420 = vrot.slane %v419, 1
    %v421 = vmax.f32 %v419, %v420
    %v422 = vrot.slane %v404, 4
    %v423 = vmax.f32 %v404, %v422
    %v424 = vrot.slane %v423, 2
    %v425 = vmax.f32 %v423, %v424
    %v426 = vrot.slane %v425, 1
    %v427 = vmax.f32 %v425, %v426
    %v428 = vrot.slane %v405, 4
    %v429 = vmax.f32 %v405, %v428
    %v430 = vrot.slane %v429, 2
    %v431 = vmax.f32 %v429, %v430
    %v432 = vrot.slane %v431, 1
    %v433 = vmax.f32 %v431, %v432
    %v434 = vrot.slane %v406, 4
    %v435 = vmax.f32 %v406, %v434
    %v436 = vrot.slane %v435, 2
    %v437 = vmax.f32 %v435, %v436
    %v438 = vrot.slane %v437, 1
    %v439 = vmax.f32 %v437, %v438
    %v440 = vrot.slane %v407, 4
    %v441 = vmax.f32 %v407, %v440
    %v442 = vrot.slane %v441, 2
    %v443 = vmax.f32 %v441, %v442
    %v444 = vrot.slane %v443, 1
    %v445 = vmax.f32 %v443, %v444
    %v446 = vrot.slane %v408, 4
    %v447 = vmax.f32 %v408, %v446
    %v448 = vrot.slane %v447, 2
    %v449 = vmax.f32 %v447, %v448
    %v450 = vrot.slane %v449, 1
    %v451 = vmax.f32 %v449, %v450
    %v452 = vrot.slane %v409, 4
    %v453 = vmax.f32 %v409, %v452
    %v454 = vrot.slane %v453, 2
    %v455 = vmax.f32 %v453, %v454
    %v456 = vrot.slane %v455, 1
    %v457 = vmax.f32 %v455, %v456
    %vm466 = vcmask 1041409
    %v467 = vsel %vm466, %v333, %v327
    %vm468 = vcmask 1042434
    %v469 = vsel %vm468, %v339, %v467
    %vm470 = vcmask 1043459
    %v471 = vsel %vm470, %v345, %v469
    %vm472 = vcmask 1044484
    %v473 = vsel %vm472, %v351, %v471
    %vm474 = vcmask 1045509
    %v475 = vsel %vm474, %v357, %v473
    %vm476 = vcmask 1046534
    %v477 = vsel %vm476, %v363, %v475
    %vm478 = vcmask 1047559
    %v479 = vsel %vm478, %v369, %v477
    %v489 = vsel %vm466, %v421, %v415
    %v490 = vsel %vm468, %v427, %v489
    %v491 = vsel %vm470, %v433, %v490
    %v492 = vsel %vm472, %v439, %v491
    %v493 = vsel %vm474, %v445, %v492
    %v494 = vsel %vm476, %v451, %v493
    %v495 = vsel %vm478, %v457, %v494
    %v497 = vpack.c.bf16 %v479, %v479
    %v498 = vpack.c.bf16 %v495, %v495
    %v499 = vld [vmem:[%s3] sm:$0xf]
    %v500 = vld [vmem:[%s3 + $0x4] sm:$0xf]
    %v501 = vld [vmem:[%s3 + $0x8] sm:$0xf]
    %v502 = vld [vmem:[%s3 + $0xc] sm:$0xf]
    %v503 = vld [vmem:[%s3 + $0x10] sm:$0xf]
    %v504 = vld [vmem:[%s3 + $0x14] sm:$0xf]
    %v505 = vld [vmem:[%s3 + $0x18] sm:$0xf]
    %v506 = vld [vmem:[%s3 + $0x1c] sm:$0xf]
    %v507 = vld [vmem:[%s3 + $0x20] sm:$0xf]
    %v508 = vld [vmem:[%s3 + $0x24] sm:$0xf]
    %v509 = vld [vmem:[%s3 + $0x28] sm:$0xf]
    %v510 = vld [vmem:[%s3 + $0x2c] sm:$0xf]
    %v511 = vld [vmem:[%s3 + $0x30] sm:$0xf]
    %v512 = vld [vmem:[%s3 + $0x34] sm:$0xf]
    %v513 = vld [vmem:[%s3 + $0x38] sm:$0xf]
    %v514 = vld [vmem:[%s3 + $0x3c] sm:$0xf]
    %v515 = vld [vmem:[%s3 + $0x40] sm:$0xf]
    %v516 = vld [vmem:[%s3 + $0x44] sm:$0xf]
    %v517 = vld [vmem:[%s3 + $0x48] sm:$0xf]
    %v518 = vld [vmem:[%s3 + $0x4c] sm:$0xf]
    %v519 = vld [vmem:[%s3 + $0x50] sm:$0xf]
    %v520 = vld [vmem:[%s3 + $0x54] sm:$0xf]
    %v521 = vld [vmem:[%s3 + $0x58] sm:$0xf]
    %v522 = vld [vmem:[%s3 + $0x5c] sm:$0xf]
    %v523 = vld [vmem:[%s3 + $0x60] sm:$0xf]
    %v524 = vld [vmem:[%s3 + $0x64] sm:$0xf]
    %v525 = vld [vmem:[%s3 + $0x68] sm:$0xf]
    %v526 = vld [vmem:[%s3 + $0x6c] sm:$0xf]
    %v527 = vld [vmem:[%s3 + $0x70] sm:$0xf]
    %v528 = vld [vmem:[%s3 + $0x74] sm:$0xf]
    %v529 = vld [vmem:[%s3 + $0x78] sm:$0xf]
    %v530 = vld [vmem:[%s3 + $0x7c] sm:$0xf]
    %v531 = vld [vmem:[%s4] sm:$0x1]
    %v533 = vlaneseq
    %v534 = vshrl.u32 %v533, 7
    %v535 = vsub.s32 0, %v534
    %v536 = vrot.slane %v531, %v535
    %v570 = vunpack.c.l.b16 %v499
    %v571 = vunpack.c.l.b16 %v500
    %v572 = vunpack.c.l.b16 %v501
    %v573 = vunpack.c.l.b16 %v502
    %v574 = vunpack.c.l.b16 %v503
    %v575 = vunpack.c.l.b16 %v504
    %v576 = vunpack.c.l.b16 %v505
    %v577 = vunpack.c.l.b16 %v506
    %v578 = vunpack.c.l.b16 %v507
    %v579 = vunpack.c.l.b16 %v508
    %v580 = vunpack.c.l.b16 %v509
    %v581 = vunpack.c.l.b16 %v510
    %v582 = vunpack.c.l.b16 %v511
    %v583 = vunpack.c.l.b16 %v512
    %v584 = vunpack.c.l.b16 %v513
    %v585 = vunpack.c.l.b16 %v514
    %v586 = vunpack.c.l.b16 %v515
    %v587 = vunpack.c.l.b16 %v516
    %v588 = vunpack.c.l.b16 %v517
    %v589 = vunpack.c.l.b16 %v518
    %v590 = vunpack.c.l.b16 %v519
    %v591 = vunpack.c.l.b16 %v520
    %v592 = vunpack.c.l.b16 %v521
    %v593 = vunpack.c.l.b16 %v522
    %v594 = vunpack.c.l.b16 %v523
    %v595 = vunpack.c.l.b16 %v524
    %v596 = vunpack.c.l.b16 %v525
    %v597 = vunpack.c.l.b16 %v526
    %v598 = vunpack.c.l.b16 %v527
    %v599 = vunpack.c.l.b16 %v528
    %v600 = vunpack.c.l.b16 %v529
    %v601 = vunpack.c.l.b16 %v530
    %v602 = vpack.c.b16 %v571, %v570
    %v603 = vpack.c.b16 %v573, %v572
    %v604 = vpack.c.b16 %v575, %v574
    %v605 = vpack.c.b16 %v577, %v576
    %v606 = vpack.c.b16 %v579, %v578
    %v607 = vpack.c.b16 %v581, %v580
    %v608 = vpack.c.b16 %v583, %v582
    %v609 = vpack.c.b16 %v585, %v584
    %v610 = vpack.c.b16 %v587, %v586
    %v611 = vpack.c.b16 %v589, %v588
    %v612 = vpack.c.b16 %v591, %v590
    %v613 = vpack.c.b16 %v593, %v592
    %v614 = vpack.c.b16 %v595, %v594
    %v615 = vpack.c.b16 %v597, %v596
    %v616 = vpack.c.b16 %v599, %v598
    %v617 = vpack.c.b16 %v601, %v600
    %634 = vmatprep.subr.bf16.mxu0 0
    %635 = vmatpush1.bf16.msra.mxu0 %v602
    %636 = vmatprep.subr.bf16.mxu0 0
    %637 = vmatpush1.bf16.msra.mxu0 %v603
    %638 = vmatprep.subr.bf16.mxu0 0
    %639 = vmatpush1.bf16.msra.mxu0 %v604
    %640 = vmatprep.subr.bf16.mxu0 0
    %641 = vmatpush1.bf16.msra.mxu0 %v605
    %642 = vmatprep.subr.bf16.mxu0 0
    %643 = vmatpush1.bf16.msra.mxu0 %v606
    %644 = vmatprep.subr.bf16.mxu0 0
    %645 = vmatpush1.bf16.msra.mxu0 %v607
    %646 = vmatprep.subr.bf16.mxu0 0
    %647 = vmatpush1.bf16.msra.mxu0 %v608
    %648 = vmatprep.subr.bf16.mxu0 0
    %649 = vmatpush1.bf16.msra.mxu0 %v609
    %650 = vmatprep.subr.bf16.mxu0 0
    %651 = vmatpush1.bf16.msra.mxu0 %v610
    %652 = vmatprep.subr.bf16.mxu0 0
    %653 = vmatpush1.bf16.msra.mxu0 %v611
    %654 = vmatprep.subr.bf16.mxu0 0
    %655 = vmatpush1.bf16.msra.mxu0 %v612
    %656 = vmatprep.subr.bf16.mxu0 0
    %657 = vmatpush1.bf16.msra.mxu0 %v613
    %658 = vmatprep.subr.bf16.mxu0 0
    %659 = vmatpush1.bf16.msra.mxu0 %v614
    %660 = vmatprep.subr.bf16.mxu0 0
    %661 = vmatpush1.bf16.msra.mxu0 %v615
    %662 = vmatprep.subr.bf16.mxu0 0
    %663 = vmatpush1.bf16.msra.mxu0 %v616
    %664 = vmatprep.subr.bf16.mxu0 0
    %665 = vmatpush1.bf16.msra.mxu0 %v617
    %666 = vmatprep.mubr.bf16.mxu0 %v498
    %667 = vmatmul.mubr.bf16.gmra.mrb[0].mxu0 %v497
    %v668 = vpop.f32.mrb[0].mxu0
    %v669 = vadd.f32 %v536, %v668
    %v670 = vpop.f32.mrb[0].mxu0
    %v671 = vpop.f32.mrb[0].mxu0
    %v672 = vpop.f32.mrb[0].mxu0
    %673 = vdwg.mxu0
    %v674 = vmax.f32 %v669, 0.0
    %v675 = vpack.c.bf16 %v674, %v674
    %v676 = vld [vmem:[#allocation5] sm:$0xf]
    %v677 = vld [vmem:[#allocation5 + $0x4] sm:$0xf]
    %v678 = vld [vmem:[#allocation5 + $0x8] sm:$0xf]
    %v679 = vld [vmem:[#allocation5 + $0xc] sm:$0xf]
    %v680 = vld [vmem:[#allocation5 + $0x10] sm:$0xf]
    %v681 = vld [vmem:[#allocation5 + $0x14] sm:$0xf]
    %v682 = vld [vmem:[#allocation5 + $0x18] sm:$0xf]
    %v683 = vld [vmem:[#allocation5 + $0x1c] sm:$0xf]
    %v684 = vld [vmem:[#allocation5 + $0x20] sm:$0xf]
    %v685 = vld [vmem:[#allocation5 + $0x24] sm:$0xf]
    %v686 = vld [vmem:[#allocation5 + $0x28] sm:$0xf]
    %v687 = vld [vmem:[#allocation5 + $0x2c] sm:$0xf]
    %v688 = vld [vmem:[#allocation5 + $0x30] sm:$0xf]
    %v689 = vld [vmem:[#allocation5 + $0x34] sm:$0xf]
    %v690 = vld [vmem:[#allocation5 + $0x38] sm:$0xf]
    %v691 = vld [vmem:[#allocation5 + $0x3c] sm:$0xf]
    %v692 = vld [vmem:[%s6] sm:$0x1]
    %v694 = vlaneseq
    %v695 = vshrl.u32 %v694, 7
    %v696 = vsub.s32 0, %v695
    %v697 = vrot.slane %v692, %v696
    %v715 = vunpack.c.l.b16 %v676
    %v716 = vunpack.c.l.b16 %v677
    %v717 = vunpack.c.l.b16 %v678
    %v718 = vunpack.c.l.b16 %v679
    %v719 = vunpack.c.l.b16 %v680
    %v720 = vunpack.c.l.b16 %v681
    %v721 = vunpack.c.l.b16 %v682
    %v722 = vunpack.c.l.b16 %v683
    %v723 = vunpack.c.l.b16 %v684
    %v724 = vunpack.c.l.b16 %v685
    %v725 = vunpack.c.l.b16 %v686
    %v726 = vunpack.c.l.b16 %v687
    %v727 = vunpack.c.l.b16 %v688
    %v728 = vunpack.c.l.b16 %v689
    %v729 = vunpack.c.l.b16 %v690
    %v730 = vunpack.c.l.b16 %v691
    %v731 = vpack.c.b16 %v716, %v715
    %v732 = vpack.c.b16 %v718, %v717
    %v733 = vpack.c.b16 %v720, %v719
    %v734 = vpack.c.b16 %v722, %v721
    %v735 = vpack.c.b16 %v724, %v723
    %v736 = vpack.c.b16 %v726, %v725
    %v737 = vpack.c.b16 %v728, %v727
    %v738 = vpack.c.b16 %v730, %v729
    %747 = vmatprep.subr.bf16.mxu0 0
    %748 = vmatpush1.bf16.msra.mxu0 %v731
    %749 = vmatprep.subr.bf16.mxu0 0
    %750 = vmatpush1.bf16.msra.mxu0 %v732
    %751 = vmatprep.subr.bf16.mxu0 0
    %752 = vmatpush1.bf16.msra.mxu0 %v733
    %753 = vmatprep.subr.bf16.mxu0 0
    %754 = vmatpush1.bf16.msra.mxu0 %v734
    %755 = vmatprep.subr.bf16.mxu0 0
    %756 = vmatpush1.bf16.msra.mxu0 %v735
    %757 = vmatprep.subr.bf16.mxu0 0
    %758 = vmatpush1.bf16.msra.mxu0 %v736
    %759 = vmatprep.subr.bf16.mxu0 0
    %760 = vmatpush1.bf16.msra.mxu0 %v737
    %761 = vmatprep.subr.bf16.mxu0 0
    %762 = vmatpush1.bf16.msra.mxu0 %v738
    %763 = vmatprep.subr.bf16.mxu0 0
    %764 = vmatpush1.bf16.msra.mxu0 0
    %765 = vmatprep.subr.bf16.mxu0 0
    %766 = vmatpush1.bf16.msra.mxu0 0
    %767 = vmatprep.subr.bf16.mxu0 0
    %768 = vmatpush1.bf16.msra.mxu0 0
    %769 = vmatprep.subr.bf16.mxu0 0
    %770 = vmatpush1.bf16.msra.mxu0 0
    %771 = vmatprep.subr.bf16.mxu0 0
    %772 = vmatpush1.bf16.msra.mxu0 0
    %773 = vmatprep.subr.bf16.mxu0 0
    %774 = vmatpush1.bf16.msra.mxu0 0
    %775 = vmatprep.subr.bf16.mxu0 0
    %776 = vmatpush1.bf16.msra.mxu0 0
    %777 = vmatprep.subr.bf16.mxu0 0
    %778 = vmatpush1.bf16.msra.mxu0 0
    %779 = vmatprep.mubr.bf16.mxu0 0
    %780 = vmatmul.mubr.bf16.gmra.mrb[0].mxu0 %v675
    %v781 = vpop.f32.mrb[0].mxu0
    %v782 = vadd.f32 %v697, %v781
    %v783 = vpop.f32.mrb[0].mxu0
    %v784 = vpop.f32.mrb[0].mxu0
    %v785 = vpop.f32.mrb[0].mxu0
    %786 = vdwg.mxu0
    %v787 = vmax.f32 %v782, 0.0
    %v788 = vpack.c.bf16 %v787, %v787
    %v789 = vld [vmem:[#allocation7] sm:$0xf]
    %v790 = vld [vmem:[#allocation7 + $0x4] sm:$0xf]
    %v791 = vld [vmem:[#allocation7 + $0x8] sm:$0xf]
    %v792 = vld [vmem:[#allocation7 + $0xc] sm:$0xf]
    %v793 = vld [vmem:[#allocation7 + $0x10] sm:$0xf]
    %v794 = vld [vmem:[#allocation7 + $0x14] sm:$0xf]
    %v795 = vld [vmem:[#allocation7 + $0x18] sm:$0xf]
    %v796 = vld [vmem:[#allocation7 + $0x1c] sm:$0xf]
    %v797 = vld [vmem:[#allocation7 + $0x20] sm:$0xf]
    %v798 = vld [vmem:[#allocation7 + $0x24] sm:$0xf]
    %v799 = vld [vmem:[#allocation7 + $0x28] sm:$0xf]
    %v800 = vld [vmem:[#allocation7 + $0x2c] sm:$0xf]
    %v801 = vld [vmem:[#allocation7 + $0x30] sm:$0xf]
    %v802 = vld [vmem:[#allocation7 + $0x34] sm:$0xf]
    %v803 = vld [vmem:[#allocation7 + $0x38] sm:$0xf]
    %v804 = vld [vmem:[#allocation7 + $0x3c] sm:$0xf]
    %v805 = vld [vmem:[%s8] sm:$0x1]
    %v807 = vlaneseq
    %v808 = vshrl.u32 %v807, 7
    %v809 = vsub.s32 0, %v808
    %v810 = vrot.slane %v805, %v809
    %v828 = vunpack.c.l.b16 %v789
    %v829 = vunpack.c.l.b16 %v790
    %v830 = vunpack.c.l.b16 %v791
    %v831 = vunpack.c.l.b16 %v792
    %v832 = vunpack.c.l.b16 %v793
    %v833 = vunpack.c.l.b16 %v794
    %v834 = vunpack.c.l.b16 %v795
    %v835 = vunpack.c.l.b16 %v796
    %v836 = vunpack.c.l.b16 %v797
    %v837 = vunpack.c.l.b16 %v798
    %v838 = vunpack.c.l.b16 %v799
    %v839 = vunpack.c.l.b16 %v800
    %v840 = vunpack.c.l.b16 %v801
    %v841 = vunpack.c.l.b16 %v802
    %v842 = vunpack.c.l.b16 %v803
    %v843 = vunpack.c.l.b16 %v804
    %v844 = vpack.c.b16 %v829, %v828
    %v845 = vpack.c.b16 %v831, %v830
    %v846 = vpack.c.b16 %v833, %v832
    %v847 = vpack.c.b16 %v835, %v834
    %v848 = vpack.c.b16 %v837, %v836
    %v849 = vpack.c.b16 %v839, %v838
    %v850 = vpack.c.b16 %v841, %v840
    %v851 = vpack.c.b16 %v843, %v842
    %860 = vmatprep.subr.bf16.mxu0 0
    %861 = vmatpush1.bf16.msra.mxu0 %v844
    %862 = vmatprep.subr.bf16.mxu0 0
    %863 = vmatpush1.bf16.msra.mxu0 %v845
    %864 = vmatprep.subr.bf16.mxu0 0
    %865 = vmatpush1.bf16.msra.mxu0 %v846
    %866 = vmatprep.subr.bf16.mxu0 0
    %867 = vmatpush1.bf16.msra.mxu0 %v847
    %868 = vmatprep.subr.bf16.mxu0 0
    %869 = vmatpush1.bf16.msra.mxu0 %v848
    %870 = vmatprep.subr.bf16.mxu0 0
    %871 = vmatpush1.bf16.msra.mxu0 %v849
    %872 = vmatprep.subr.bf16.mxu0 0
    %873 = vmatpush1.bf16.msra.mxu0 %v850
    %874 = vmatprep.subr.bf16.mxu0 0
    %875 = vmatpush1.bf16.msra.mxu0 %v851
    %876 = vmatprep.subr.bf16.mxu0 0
    %877 = vmatpush1.bf16.msra.mxu0 0
    %878 = vmatprep.subr.bf16.mxu0 0
    %879 = vmatpush1.bf16.msra.mxu0 0
    %880 = vmatprep.subr.bf16.mxu0 0
    %881 = vmatpush1.bf16.msra.mxu0 0
    %882 = vmatprep.subr.bf16.mxu0 0
    %883 = vmatpush1.bf16.msra.mxu0 0
    %884 = vmatprep.subr.bf16.mxu0 0
    %885 = vmatpush1.bf16.msra.mxu0 0
    %886 = vmatprep.subr.bf16.mxu0 0
    %887 = vmatpush1.bf16.msra.mxu0 0
    %888 = vmatprep.subr.bf16.mxu0 0
    %889 = vmatpush1.bf16.msra.mxu0 0
    %890 = vmatprep.subr.bf16.mxu0 0
    %891 = vmatpush1.bf16.msra.mxu0 0
    %892 = vmatprep.mubr.bf16.mxu0 0
    %893 = vmatmul.mubr.bf16.gmra.mrb[0].mxu0 %v788
    %v894 = vpop.f32.mrb[0].mxu0
    %v895 = vadd.f32 %v810, %v894
    %v896 = vpop.f32.mrb[0].mxu0
    %v897 = vpop.f32.mrb[0].mxu0
    %v898 = vpop.f32.mrb[0].mxu0
    %899 = vdwg.mxu0
    %900 = vst [vmem:[#allocation8] sm:$0xff] %v895
    // Predicated region
    $region50: #{tpu_custom_call.1} parent=1 // pred_check
      _
    $region51: #{tpu_custom_call.1} parent=1 // pred_check_branch
      %902 = sbr.rel (0) target = $region53
    $region52: #{tpu_custom_call.1} parent=1 // pred_region
      %s904 = ssub.s32 128, 128
      %905 = vsyncadd [#allocation4], %s904
      %s907 = sshll.u32 [#allocation8], 4
      %s908 = int_to_ptr.vmem [resolvable:$true] %s907
      %910 = dma.vmem_to_hbm [thread:$0]  %s908, 128, %s9, [#allocation4]
    $region53: #{tpu_custom_call.1} parent=1 // pred_fallthru
      _
    // Predicated region
    $region54: #{tpu_custom_call.1} parent=1 // pred_check
      _
    $region55: #{tpu_custom_call.1} parent=1 // pred_check_branch
      %912 = sbr.rel (0) target = $region57
    $region56: #{tpu_custom_call.1} parent=1 // pred_region
      %913 = dma.done [#allocation4], 128
    $region57: #{tpu_custom_call.1} parent=1 // pred_fallthru
      _
    %914 = vsyncpa [#allocation3], 1
    %915 = vsyncpa [#allocation6], 1
    %916 = vsyncpa [#allocation4], 1

</llo_original>
